<compile_context>
chip_gen: v7x
topology: tpu7x:2x2x1
jax: 0.10.0
libtpu: 0.0.40
codegen_flags: <defaults>
</compile_context>

<pallas_src>
import functools

import numpy as np

import jax
import jax.numpy as jnp
from jax.experimental import pallas as pl
from jax.experimental.pallas import tpu as pltpu


LANE = 128        # lane width of the flattened data stream
ROW_TILE = 2048   # rows per grid step -> 2048*128*4 B = 1 MiB per f32 input block
NCORES = 2        # leading "parallel" grid axis (sharded across TCs on v7x)


def _cdiv(a, b):
    return -(-a // b)


def _round_up(x, m):
    return _cdiv(x, m) * m


def _make_stats_kernel(num_classes):
    """Build the reduction kernel and return (kernel, n_rows, row_layout)."""
    nc = num_classes
    nc1 = nc + 1
    lc_row = 0              # label counts for ids 0..nc        (nc1 rows)
    tp_row = nc1            # true positives for ids 1..nc      (nc rows)
    pc_row = nc1 + nc       # prediction counts for ids 1..nc   (nc rows)
    sq_row = nc1 + 2 * nc   # per-lane sum of squared error     (1 row)
    n_rows = _round_up(sq_row + 1, 8)

    def kernel(x_ref, t_ref, acc_ref):
        step = pl.program_id(1)

        @pl.when(step == 0)
        def _init():
            acc_ref[...] = jnp.zeros_like(acc_ref)

        # In-kernel cast (inputs arrive in native dtype, no wrapper-side copy).
        x = x_ref[...].astype(jnp.float32)        # (ROW_TILE, LANE)
        t = t_ref[...].astype(jnp.float32)

        # ---- MSE partial: per-lane bins, merged in the wrapper ----
        d = x - t
        acc_ref[sq_row:sq_row + 1, :] += jnp.sum(d * d, axis=0, keepdims=True)

        # ---- F1 statistics (torch .long() == truncation toward zero) ----
        preds = x.astype(jnp.int32)
        labels = t.astype(jnp.int32)
        eq = preds == labels

        for l in range(nc1):
            lab_l = labels == l
            r = lc_row + l
            acc_ref[r:r + 1, :] += jnp.sum(
                lab_l.astype(jnp.float32), axis=0, keepdims=True)
            if l >= 1:
                pred_l = preds == l
                tp_l = jnp.logical_and(eq, lab_l)
                r = tp_row + (l - 1)
                acc_ref[r:r + 1, :] += jnp.sum(
                    tp_l.astype(jnp.float32), axis=0, keepdims=True)
                r = pc_row + (l - 1)
                acc_ref[r:r + 1, :] += jnp.sum(
                    pred_l.astype(jnp.float32), axis=0, keepdims=True)

    return kernel, n_rows, (lc_row, tp_row, pc_row, sq_row)


def f1mse_loss(inputs, targets, num_classes=4, row_tile=ROW_TILE):
    """JAX/Pallas equivalent of F1MSE.forward (weighted F1 * mean-MSE)."""
    assert inputs.shape == targets.shape
    n_elems = int(np.prod(inputs.shape))
    nc = num_classes
    nc1 = nc + 1

    kernel, n_rows, (lc_row, tp_row, pc_row, sq_row) = _make_stats_kernel(nc)

    # ---- flatten to a (rows, 128) lane-dense stream (reshape only, no cast) ----
    x = inputs.reshape(-1)
    t = targets.reshape(-1)

    rows = _cdiv(n_elems, LANE)
    tr = min(row_tile, _round_up(_cdiv(rows, NCORES), 8))     # multiple of 8
    tiles_per_core = _cdiv(rows, NCORES * tr)
    rows_pad = NCORES * tr * tiles_per_core
    pad = rows_pad * LANE - n_elems
    if pad:
        # Sentinel -1.0 in BOTH streams: diff == 0 (no MSE pollution) and the
        # value matches no tracked class id (no count pollution).
        x = jnp.pad(x, (0, pad), constant_values=-1.0)
        t = jnp.pad(t, (0, pad), constant_values=-1.0)
    x2 = x.reshape(rows_pad, LANE)
    t2 = t.reshape(rows_pad, LANE)

    in_spec = pl.BlockSpec((tr, LANE), lambda c, i: (c * tiles_per_core + i, 0))
    out_spec = pl.BlockSpec((None, n_rows, LANE), lambda c, i: (c, 0, 0))

    partials = pl.pallas_call(
        kernel,
        out_shape=jax.ShapeDtypeStruct((NCORES, n_rows, LANE), jnp.float32),
        grid_spec=pltpu.PrefetchScalarGridSpec(
            num_scalar_prefetch=0,
            grid=(NCORES, tiles_per_core),
            in_specs=[in_spec, in_spec],
            out_specs=out_spec,
        ),
        compiler_params=pltpu.CompilerParams(
            dimension_semantics=("parallel", "arbitrary")),
    )(x2, t2)

    # ---- tiny scalar epilogue: merge per-core / per-lane partials ----
    stats = jnp.sum(partials, axis=(0, 2))             # (n_rows,)
    lc_all = stats[lc_row:lc_row + nc1]                 # label counts, ids 0..nc
    tp = stats[tp_row:tp_row + nc]                      # ids 1..nc
    pc = stats[pc_row:pc_row + nc]
    sq = stats[sq_row]

    n = jnp.asarray(n_elems, jnp.float32)
    mse = sq / n

    num_unique = jnp.sum((lc_all > 0).astype(jnp.float32))
    lc = lc_all[1:]
    precision = jnp.where(pc > 0, tp / jnp.maximum(pc, 1.0), 0.0)
    recall = jnp.where(lc > 0, tp / jnp.maximum(lc, 1.0), 0.0)
    denom = precision + recall
    f1 = jnp.where(denom > 0,
                   2.0 * precision * recall / jnp.maximum(denom, 1e-30), 0.0)
    # torch loops label_id = 1 .. num_unique (inclusive)
    label_ids = jnp.arange(1, nc + 1, dtype=jnp.float32)
    f1 = jnp.where(label_ids <= num_unique, f1, 0.0)
    f1_weighted = jnp.sum(f1 * lc) / n
    return (1.0 - f1_weighted) * mse


# --------------------------------------------------------------------------- #
# Pure numpy reference mirroring the PyTorch module exactly
# --------------------------------------------------------------------------- #
def _ref_f1mse_numpy(inputs, targets):
    x = np.asarray(inputs, dtype=np.float64)
    t = np.asarray(targets, dtype=np.float64)
    mse = np.mean((x - t) ** 2)

    preds = np.trunc(x).astype(np.int64).ravel()    # .long()
    labels = np.trunc(t).astype(np.int64).ravel()
    n = labels.size
    num_unique = np.unique(labels).size

    f1_score = 0.0
    for label_id in range(1, num_unique + 1):
        true_count = np.float64(np.sum(labels == label_id))
        tp = np.float64(np.sum((labels == preds) & (labels == label_id)))
        pred_count = np.float64(np.sum(preds == label_id))
        with np.errstate(divide="ignore", invalid="ignore"):
            precision = tp / pred_count
            if np.isnan(precision):
                precision = np.float64(0.0)
            recall = tp / true_count
            f1 = 2.0 * precision * recall / (precision + recall)
            if np.isnan(f1):
                f1 = np.float64(0.0)
        f1_score += float(f1 * true_count)
    f1_weighted = f1_score / n
    return (1.0 - f1_weighted) * mse


# --------------------------------------------------------------------------- #
if __name__ == "__main__":
    NC = 4
    shape = (2, 4, 16, 16)          # batch=2, channels=4, spatial=16x16

    key = jax.random.PRNGKey(0)
    k1, k2 = jax.random.split(key)
    targets = jax.random.randint(k1, shape, 0, NC).astype(jnp.float32)
    inputs = jax.random.uniform(k2, shape, jnp.float32,
                                minval=0.0, maxval=float(NC))

    loss_fn = jax.jit(functools.partial(f1mse_loss, num_classes=NC))
    loss = jax.block_until_ready(loss_fn(inputs, targets))

    ref = _ref_f1mse_numpy(np.asarray(inputs), np.asarray(targets))
    loss_f = float(loss)
    assert np.isfinite(loss_f), loss_f
    assert abs(loss_f - ref) <= 1e-5 * max(1.0, abs(ref)), (loss_f, ref)

    print("KERNEL_OK")
</pallas_src>

<mosaic_0001>
module attributes {stable_mosaic.version = 11 : i64} {
  func.func @kernel(%arg0: i32, %arg1: i32, %arg2: memref<8x128xf32, #tpu.memory_space<vmem>>, %arg3: memref<8x128xf32, #tpu.memory_space<vmem>>, %arg4: memref<1x16x128xf32, #tpu.memory_space<vmem>>) attributes {dimension_semantics = [#tpu.dimension_semantics<parallel>, #tpu.dimension_semantics<arbitrary>], iteration_bounds = array<i64: 2, 1>, scalar_prefetch = 0 : i64, scratch_operands = 0 : i64, tpu.core_type = #tpu.core_type<tc>, window_params = [{transform_indices = @transform_0, window_bounds = array<i64: 8, 128>}, {transform_indices = @transform_1, window_bounds = array<i64: 8, 128>}, {transform_indices = @transform_2, window_bounds = array<i64: 1, 16, 128>}]} {
    %c0_i32 = arith.constant 0 : i32
    %0 = arith.cmpi eq, %arg1, %c0_i32 : i32
    %1 = arith.extui %0 : i1 to i32
    %c0_i32_0 = arith.constant 0 : i32
    %2 = arith.cmpi ne, %1, %c0_i32_0 : i32
    scf.if %2 {
      %cst_93 = arith.constant 0.000000e+00 : f32
      %170 = vector.broadcast %cst_93 : f32 to vector<16x128xf32>
      %c0_94 = arith.constant 0 : index
      %c0_95 = arith.constant 0 : index
      %c0_96 = arith.constant 0 : index
      %171 = vector.load %arg4[%c0_94, %c0_95, %c0_96] : memref<1x16x128xf32, #tpu.memory_space<vmem>>, vector<1x16x128xf32>
      %172 = vector.shape_cast %171 : vector<1x16x128xf32> to vector<16x128xf32>
      %173 = vector.shape_cast %170 : vector<16x128xf32> to vector<1x16x128xf32>
      tpu.vector_store %arg4[%c0_94, %c0_95, %c0_96], %173 {strides = array<i32>} : memref<1x16x128xf32, #tpu.memory_space<vmem>>, vector<1x16x128xf32>,
    } else {
    }
    %c0 = arith.constant 0 : index
    %c0_1 = arith.constant 0 : index
    %3 = vector.load %arg2[%c0, %c0_1] : memref<8x128xf32, #tpu.memory_space<vmem>>, vector<8x128xf32>
    %c0_2 = arith.constant 0 : index
    %c0_3 = arith.constant 0 : index
    %4 = vector.load %arg3[%c0_2, %c0_3] : memref<8x128xf32, #tpu.memory_space<vmem>>, vector<8x128xf32>
    %5 = arith.subf %3, %4 : vector<8x128xf32>
    %c0_4 = arith.constant 0 : index
    %c13 = arith.constant 13 : index
    %c0_5 = arith.constant 0 : index
    %6 = vector.load %arg4[%c0_4, %c13, %c0_5] : memref<1x16x128xf32, #tpu.memory_space<vmem>>, vector<1x1x128xf32>
    %7 = vector.shape_cast %6 : vector<1x1x128xf32> to vector<1x128xf32>
    %8 = arith.mulf %5, %5 : vector<8x128xf32>
    %cst = arith.constant dense<0.000000e+00> : vector<128xf32>
    %9 = vector.multi_reduction <add>, %8, %cst [0] : vector<8x128xf32> to vector<128xf32>
    %10 = vector.shape_cast %9 : vector<128xf32> to vector<1x128xf32>
    %11 = arith.addf %7, %10 : vector<1x128xf32>
    %c0_6 = arith.constant 0 : index
    %c13_7 = arith.constant 13 : index
    %c0_8 = arith.constant 0 : index
    %12 = vector.load %arg4[%c0_6, %c13_7, %c0_8] : memref<1x16x128xf32, #tpu.memory_space<vmem>>, vector<1x1x128xf32>
    %13 = vector.shape_cast %12 : vector<1x1x128xf32> to vector<1x128xf32>
    %14 = vector.shape_cast %11 : vector<1x128xf32> to vector<1x1x128xf32>
    tpu.vector_store %arg4[%c0_6, %c13_7, %c0_8], %14 {strides = array<i32>} : memref<1x16x128xf32, #tpu.memory_space<vmem>>, vector<1x1x128xf32>,
    %15 = arith.fptosi %3 : vector<8x128xf32> to vector<8x128xi32>
    %16 = arith.fptosi %4 : vector<8x128xf32> to vector<8x128xi32>
    %17 = arith.cmpi eq, %15, %16 : vector<8x128xi32>
    %c0_i32_9 = arith.constant 0 : i32
    %18 = vector.broadcast %c0_i32_9 : i32 to vector<8x128xi32>
    %19 = arith.cmpi eq, %16, %18 : vector<8x128xi32>
    %c0_10 = arith.constant 0 : index
    %c0_11 = arith.constant 0 : index
    %c0_12 = arith.constant 0 : index
    %20 = vector.load %arg4[%c0_10, %c0_11, %c0_12] : memref<1x16x128xf32, #tpu.memory_space<vmem>>, vector<1x1x128xf32>
    %21 = vector.shape_cast %20 : vector<1x1x128xf32> to vector<1x128xf32>
    %22 = arith.extui %19 : vector<8x128xi1> to vector<8x128xi32>
    %23 = arith.sitofp %22 : vector<8x128xi32> to vector<8x128xf32>
    %cst_13 = arith.constant dense<0.000000e+00> : vector<128xf32>
    %24 = vector.multi_reduction <add>, %23, %cst_13 [0] : vector<8x128xf32> to vector<128xf32>
    %25 = vector.shape_cast %24 : vector<128xf32> to vector<1x128xf32>
    %26 = arith.addf %21, %25 : vector<1x128xf32>
    %c0_14 = arith.constant 0 : index
    %c0_15 = arith.constant 0 : index
    %c0_16 = arith.constant 0 : index
    %27 = vector.load %arg4[%c0_14, %c0_15, %c0_16] : memref<1x16x128xf32, #tpu.memory_space<vmem>>, vector<1x1x128xf32>
    %28 = vector.shape_cast %27 : vector<1x1x128xf32> to vector<1x128xf32>
    %29 = vector.shape_cast %26 : vector<1x128xf32> to vector<1x1x128xf32>
    tpu.vector_store %arg4[%c0_14, %c0_15, %c0_16], %29 {strides = array<i32>} : memref<1x16x128xf32, #tpu.memory_space<vmem>>, vector<1x1x128xf32>,
    %c1_i32 = arith.constant 1 : i32
    %30 = vector.broadcast %c1_i32 : i32 to vector<8x128xi32>
    %31 = arith.cmpi eq, %16, %30 : vector<8x128xi32>
    %c0_17 = arith.constant 0 : index
    %c1 = arith.constant 1 : index
    %c0_18 = arith.constant 0 : index
    %32 = vector.load %arg4[%c0_17, %c1, %c0_18] : memref<1x16x128xf32, #tpu.memory_space<vmem>>, vector<1x1x128xf32>
    %33 = vector.shape_cast %32 : vector<1x1x128xf32> to vector<1x128xf32>
    %34 = arith.extui %31 : vector<8x128xi1> to vector<8x128xi32>
    %35 = arith.sitofp %34 : vector<8x128xi32> to vector<8x128xf32>
    %cst_19 = arith.constant dense<0.000000e+00> : vector<128xf32>
    %36 = vector.multi_reduction <add>, %35, %cst_19 [0] : vector<8x128xf32> to vector<128xf32>
    %37 = vector.shape_cast %36 : vector<128xf32> to vector<1x128xf32>
    %38 = arith.addf %33, %37 : vector<1x128xf32>
    %c0_20 = arith.constant 0 : index
    %c1_21 = arith.constant 1 : index
    %c0_22 = arith.constant 0 : index
    %39 = vector.load %arg4[%c0_20, %c1_21, %c0_22] : memref<1x16x128xf32, #tpu.memory_space<vmem>>, vector<1x1x128xf32>
    %40 = vector.shape_cast %39 : vector<1x1x128xf32> to vector<1x128xf32>
    %41 = vector.shape_cast %38 : vector<1x128xf32> to vector<1x1x128xf32>
    tpu.vector_store %arg4[%c0_20, %c1_21, %c0_22], %41 {strides = array<i32>} : memref<1x16x128xf32, #tpu.memory_space<vmem>>, vector<1x1x128xf32>,
    %c1_i32_23 = arith.constant 1 : i32
    %42 = vector.broadcast %c1_i32_23 : i32 to vector<8x128xi32>
    %43 = arith.cmpi eq, %15, %42 : vector<8x128xi32>
    %44 = arith.andi %17, %31 : vector<8x128xi1>
    %c0_24 = arith.constant 0 : index
    %c5 = arith.constant 5 : index
    %c0_25 = arith.constant 0 : index
    %45 = vector.load %arg4[%c0_24, %c5, %c0_25] : memref<1x16x128xf32, #tpu.memory_space<vmem>>, vector<1x1x128xf32>
    %46 = vector.shape_cast %45 : vector<1x1x128xf32> to vector<1x128xf32>
    %47 = arith.extui %44 : vector<8x128xi1> to vector<8x128xi32>
    %48 = arith.sitofp %47 : vector<8x128xi32> to vector<8x128xf32>
    %cst_26 = arith.constant dense<0.000000e+00> : vector<128xf32>
    %49 = vector.multi_reduction <add>, %48, %cst_26 [0] : vector<8x128xf32> to vector<128xf32>
    %50 = vector.shape_cast %49 : vector<128xf32> to vector<1x128xf32>
    %51 = arith.addf %46, %50 : vector<1x128xf32>
    %c0_27 = arith.constant 0 : index
    %c5_28 = arith.constant 5 : index
    %c0_29 = arith.constant 0 : index
    %52 = vector.load %arg4[%c0_27, %c5_28, %c0_29] : memref<1x16x128xf32, #tpu.memory_space<vmem>>, vector<1x1x128xf32>
    %53 = vector.shape_cast %52 : vector<1x1x128xf32> to vector<1x128xf32>
    %54 = vector.shape_cast %51 : vector<1x128xf32> to vector<1x1x128xf32>
    tpu.vector_store %arg4[%c0_27, %c5_28, %c0_29], %54 {strides = array<i32>} : memref<1x16x128xf32, #tpu.memory_space<vmem>>, vector<1x1x128xf32>,
    %c0_30 = arith.constant 0 : index
    %c9 = arith.constant 9 : index
    %c0_31 = arith.constant 0 : index
    %55 = vector.load %arg4[%c0_30, %c9, %c0_31] : memref<1x16x128xf32, #tpu.memory_space<vmem>>, vector<1x1x128xf32>
    %56 = vector.shape_cast %55 : vector<1x1x128xf32> to vector<1x128xf32>
    %57 = arith.extui %43 : vector<8x128xi1> to vector<8x128xi32>
    %58 = arith.sitofp %57 : vector<8x128xi32> to vector<8x128xf32>
    %cst_32 = arith.constant dense<0.000000e+00> : vector<128xf32>
    %59 = vector.multi_reduction <add>, %58, %cst_32 [0] : vector<8x128xf32> to vector<128xf32>
    %60 = vector.shape_cast %59 : vector<128xf32> to vector<1x128xf32>
    %61 = arith.addf %56, %60 : vector<1x128xf32>
    %c0_33 = arith.constant 0 : index
    %c9_34 = arith.constant 9 : index
    %c0_35 = arith.constant 0 : index
    %62 = vector.load %arg4[%c0_33, %c9_34, %c0_35] : memref<1x16x128xf32, #tpu.memory_space<vmem>>, vector<1x1x128xf32>
    %63 = vector.shape_cast %62 : vector<1x1x128xf32> to vector<1x128xf32>
    %64 = vector.shape_cast %61 : vector<1x128xf32> to vector<1x1x128xf32>
    tpu.vector_store %arg4[%c0_33, %c9_34, %c0_35], %64 {strides = array<i32>} : memref<1x16x128xf32, #tpu.memory_space<vmem>>, vector<1x1x128xf32>,
    %c2_i32 = arith.constant 2 : i32
    %65 = vector.broadcast %c2_i32 : i32 to vector<8x128xi32>
    %66 = arith.cmpi eq, %16, %65 : vector<8x128xi32>
    %c0_36 = arith.constant 0 : index
    %c2 = arith.constant 2 : index
    %c0_37 = arith.constant 0 : index
    %67 = vector.load %arg4[%c0_36, %c2, %c0_37] : memref<1x16x128xf32, #tpu.memory_space<vmem>>, vector<1x1x128xf32>
    %68 = vector.shape_cast %67 : vector<1x1x128xf32> to vector<1x128xf32>
    %69 = arith.extui %66 : vector<8x128xi1> to vector<8x128xi32>
    %70 = arith.sitofp %69 : vector<8x128xi32> to vector<8x128xf32>
    %cst_38 = arith.constant dense<0.000000e+00> : vector<128xf32>
    %71 = vector.multi_reduction <add>, %70, %cst_38 [0] : vector<8x128xf32> to vector<128xf32>
    %72 = vector.shape_cast %71 : vector<128xf32> to vector<1x128xf32>
    %73 = arith.addf %68, %72 : vector<1x128xf32>
    %c0_39 = arith.constant 0 : index
    %c2_40 = arith.constant 2 : index
    %c0_41 = arith.constant 0 : index
    %74 = vector.load %arg4[%c0_39, %c2_40, %c0_41] : memref<1x16x128xf32, #tpu.memory_space<vmem>>, vector<1x1x128xf32>
    %75 = vector.shape_cast %74 : vector<1x1x128xf32> to vector<1x128xf32>
    %76 = vector.shape_cast %73 : vector<1x128xf32> to vector<1x1x128xf32>
    tpu.vector_store %arg4[%c0_39, %c2_40, %c0_41], %76 {strides = array<i32>} : memref<1x16x128xf32, #tpu.memory_space<vmem>>, vector<1x1x128xf32>,
    %c2_i32_42 = arith.constant 2 : i32
    %77 = vector.broadcast %c2_i32_42 : i32 to vector<8x128xi32>
    %78 = arith.cmpi eq, %15, %77 : vector<8x128xi32>
    %79 = arith.andi %17, %66 : vector<8x128xi1>
    %c0_43 = arith.constant 0 : index
    %c6 = arith.constant 6 : index
    %c0_44 = arith.constant 0 : index
    %80 = vector.load %arg4[%c0_43, %c6, %c0_44] : memref<1x16x128xf32, #tpu.memory_space<vmem>>, vector<1x1x128xf32>
    %81 = vector.shape_cast %80 : vector<1x1x128xf32> to vector<1x128xf32>
    %82 = arith.extui %79 : vector<8x128xi1> to vector<8x128xi32>
    %83 = arith.sitofp %82 : vector<8x128xi32> to vector<8x128xf32>
    %cst_45 = arith.constant dense<0.000000e+00> : vector<128xf32>
    %84 = vector.multi_reduction <add>, %83, %cst_45 [0] : vector<8x128xf32> to vector<128xf32>
    %85 = vector.shape_cast %84 : vector<128xf32> to vector<1x128xf32>
    %86 = arith.addf %81, %85 : vector<1x128xf32>
    %c0_46 = arith.constant 0 : index
    %c6_47 = arith.constant 6 : index
    %c0_48 = arith.constant 0 : index
    %87 = vector.load %arg4[%c0_46, %c6_47, %c0_48] : memref<1x16x128xf32, #tpu.memory_space<vmem>>, vector<1x1x128xf32>
    %88 = vector.shape_cast %87 : vector<1x1x128xf32> to vector<1x128xf32>
    %89 = vector.shape_cast %86 : vector<1x128xf32> to vector<1x1x128xf32>
    tpu.vector_store %arg4[%c0_46, %c6_47, %c0_48], %89 {strides = array<i32>} : memref<1x16x128xf32, #tpu.memory_space<vmem>>, vector<1x1x128xf32>,
    %c0_49 = arith.constant 0 : index
    %c10 = arith.constant 10 : index
    %c0_50 = arith.constant 0 : index
    %90 = vector.load %arg4[%c0_49, %c10, %c0_50] : memref<1x16x128xf32, #tpu.memory_space<vmem>>, vector<1x1x128xf32>
    %91 = vector.shape_cast %90 : vector<1x1x128xf32> to vector<1x128xf32>
    %92 = arith.extui %78 : vector<8x128xi1> to vector<8x128xi32>
    %93 = arith.sitofp %92 : vector<8x128xi32> to vector<8x128xf32>
    %cst_51 = arith.constant dense<0.000000e+00> : vector<128xf32>
    %94 = vector.multi_reduction <add>, %93, %cst_51 [0] : vector<8x128xf32> to vector<128xf32>
    %95 = vector.shape_cast %94 : vector<128xf32> to vector<1x128xf32>
    %96 = arith.addf %91, %95 : vector<1x128xf32>
    %c0_52 = arith.constant 0 : index
    %c10_53 = arith.constant 10 : index
    %c0_54 = arith.constant 0 : index
    %97 = vector.load %arg4[%c0_52, %c10_53, %c0_54] : memref<1x16x128xf32, #tpu.memory_space<vmem>>, vector<1x1x128xf32>
    %98 = vector.shape_cast %97 : vector<1x1x128xf32> to vector<1x128xf32>
    %99 = vector.shape_cast %96 : vector<1x128xf32> to vector<1x1x128xf32>
    tpu.vector_store %arg4[%c0_52, %c10_53, %c0_54], %99 {strides = array<i32>} : memref<1x16x128xf32, #tpu.memory_space<vmem>>, vector<1x1x128xf32>,
    %c3_i32 = arith.constant 3 : i32
    %100 = vector.broadcast %c3_i32 : i32 to vector<8x128xi32>
    %101 = arith.cmpi eq, %16, %100 : vector<8x128xi32>
    %c0_55 = arith.constant 0 : index
    %c3 = arith.constant 3 : index
    %c0_56 = arith.constant 0 : index
    %102 = vector.load %arg4[%c0_55, %c3, %c0_56] : memref<1x16x128xf32, #tpu.memory_space<vmem>>, vector<1x1x128xf32>
    %103 = vector.shape_cast %102 : vector<1x1x128xf32> to vector<1x128xf32>
    %104 = arith.extui %101 : vector<8x128xi1> to vector<8x128xi32>
    %105 = arith.sitofp %104 : vector<8x128xi32> to vector<8x128xf32>
    %cst_57 = arith.constant dense<0.000000e+00> : vector<128xf32>
    %106 = vector.multi_reduction <add>, %105, %cst_57 [0] : vector<8x128xf32> to vector<128xf32>
    %107 = vector.shape_cast %106 : vector<128xf32> to vector<1x128xf32>
    %108 = arith.addf %103, %107 : vector<1x128xf32>
    %c0_58 = arith.constant 0 : index
    %c3_59 = arith.constant 3 : index
    %c0_60 = arith.constant 0 : index
    %109 = vector.load %arg4[%c0_58, %c3_59, %c0_60] : memref<1x16x128xf32, #tpu.memory_space<vmem>>, vector<1x1x128xf32>
    %110 = vector.shape_cast %109 : vector<1x1x128xf32> to vector<1x128xf32>
    %111 = vector.shape_cast %108 : vector<1x128xf32> to vector<1x1x128xf32>
    tpu.vector_store %arg4[%c0_58, %c3_59, %c0_60], %111 {strides = array<i32>} : memref<1x16x128xf32, #tpu.memory_space<vmem>>, vector<1x1x128xf32>,
    %c3_i32_61 = arith.constant 3 : i32
    %112 = vector.broadcast %c3_i32_61 : i32 to vector<8x128xi32>
    %113 = arith.cmpi eq, %15, %112 : vector<8x128xi32>
    %114 = arith.andi %17, %101 : vector<8x128xi1>
    %c0_62 = arith.constant 0 : index
    %c7 = arith.constant 7 : index
    %c0_63 = arith.constant 0 : index
    %115 = vector.load %arg4[%c0_62, %c7, %c0_63] : memref<1x16x128xf32, #tpu.memory_space<vmem>>, vector<1x1x128xf32>
    %116 = vector.shape_cast %115 : vector<1x1x128xf32> to vector<1x128xf32>
    %117 = arith.extui %114 : vector<8x128xi1> to vector<8x128xi32>
    %118 = arith.sitofp %117 : vector<8x128xi32> to vector<8x128xf32>
    %cst_64 = arith.constant dense<0.000000e+00> : vector<128xf32>
    %119 = vector.multi_reduction <add>, %118, %cst_64 [0] : vector<8x128xf32> to vector<128xf32>
    %120 = vector.shape_cast %119 : vector<128xf32> to vector<1x128xf32>
    %121 = arith.addf %116, %120 : vector<1x128xf32>
    %c0_65 = arith.constant 0 : index
    %c7_66 = arith.constant 7 : index
    %c0_67 = arith.constant 0 : index
    %122 = vector.load %arg4[%c0_65, %c7_66, %c0_67] : memref<1x16x128xf32, #tpu.memory_space<vmem>>, vector<1x1x128xf32>
    %123 = vector.shape_cast %122 : vector<1x1x128xf32> to vector<1x128xf32>
    %124 = vector.shape_cast %121 : vector<1x128xf32> to vector<1x1x128xf32>
    tpu.vector_store %arg4[%c0_65, %c7_66, %c0_67], %124 {strides = array<i32>} : memref<1x16x128xf32, #tpu.memory_space<vmem>>, vector<1x1x128xf32>,
    %c0_68 = arith.constant 0 : index
    %c11 = arith.constant 11 : index
    %c0_69 = arith.constant 0 : index
    %125 = vector.load %arg4[%c0_68, %c11, %c0_69] : memref<1x16x128xf32, #tpu.memory_space<vmem>>, vector<1x1x128xf32>
    %126 = vector.shape_cast %125 : vector<1x1x128xf32> to vector<1x128xf32>
    %127 = arith.extui %113 : vector<8x128xi1> to vector<8x128xi32>
    %128 = arith.sitofp %127 : vector<8x128xi32> to vector<8x128xf32>
    %cst_70 = arith.constant dense<0.000000e+00> : vector<128xf32>
    %129 = vector.multi_reduction <add>, %128, %cst_70 [0] : vector<8x128xf32> to vector<128xf32>
    %130 = vector.shape_cast %129 : vector<128xf32> to vector<1x128xf32>
    %131 = arith.addf %126, %130 : vector<1x128xf32>
    %c0_71 = arith.constant 0 : index
    %c11_72 = arith.constant 11 : index
    %c0_73 = arith.constant 0 : index
    %132 = vector.load %arg4[%c0_71, %c11_72, %c0_73] : memref<1x16x128xf32, #tpu.memory_space<vmem>>, vector<1x1x128xf32>
    %133 = vector.shape_cast %132 : vector<1x1x128xf32> to vector<1x128xf32>
    %134 = vector.shape_cast %131 : vector<1x128xf32> to vector<1x1x128xf32>
    tpu.vector_store %arg4[%c0_71, %c11_72, %c0_73], %134 {strides = array<i32>} : memref<1x16x128xf32, #tpu.memory_space<vmem>>, vector<1x1x128xf32>,
    %c4_i32 = arith.constant 4 : i32
    %135 = vector.broadcast %c4_i32 : i32 to vector<8x128xi32>
    %136 = arith.cmpi eq, %16, %135 : vector<8x128xi32>
    %c0_74 = arith.constant 0 : index
    %c4 = arith.constant 4 : index
    %c0_75 = arith.constant 0 : index
    %137 = vector.load %arg4[%c0_74, %c4, %c0_75] : memref<1x16x128xf32, #tpu.memory_space<vmem>>, vector<1x1x128xf32>
    %138 = vector.shape_cast %137 : vector<1x1x128xf32> to vector<1x128xf32>
    %139 = arith.extui %136 : vector<8x128xi1> to vector<8x128xi32>
    %140 = arith.sitofp %139 : vector<8x128xi32> to vector<8x128xf32>
    %cst_76 = arith.constant dense<0.000000e+00> : vector<128xf32>
    %141 = vector.multi_reduction <add>, %140, %cst_76 [0] : vector<8x128xf32> to vector<128xf32>
    %142 = vector.shape_cast %141 : vector<128xf32> to vector<1x128xf32>
    %143 = arith.addf %138, %142 : vector<1x128xf32>
    %c0_77 = arith.constant 0 : index
    %c4_78 = arith.constant 4 : index
    %c0_79 = arith.constant 0 : index
    %144 = vector.load %arg4[%c0_77, %c4_78, %c0_79] : memref<1x16x128xf32, #tpu.memory_space<vmem>>, vector<1x1x128xf32>
    %145 = vector.shape_cast %144 : vector<1x1x128xf32> to vector<1x128xf32>
    %146 = vector.shape_cast %143 : vector<1x128xf32> to vector<1x1x128xf32>
    tpu.vector_store %arg4[%c0_77, %c4_78, %c0_79], %146 {strides = array<i32>} : memref<1x16x128xf32, #tpu.memory_space<vmem>>, vector<1x1x128xf32>,
    %c4_i32_80 = arith.constant 4 : i32
    %147 = vector.broadcast %c4_i32_80 : i32 to vector<8x128xi32>
    %148 = arith.cmpi eq, %15, %147 : vector<8x128xi32>
    %149 = arith.andi %17, %136 : vector<8x128xi1>
    %c0_81 = arith.constant 0 : index
    %c8 = arith.constant 8 : index
    %c0_82 = arith.constant 0 : index
    %150 = vector.load %arg4[%c0_81, %c8, %c0_82] : memref<1x16x128xf32, #tpu.memory_space<vmem>>, vector<1x1x128xf32>
    %151 = vector.shape_cast %150 : vector<1x1x128xf32> to vector<1x128xf32>
    %152 = arith.extui %149 : vector<8x128xi1> to vector<8x128xi32>
    %153 = arith.sitofp %152 : vector<8x128xi32> to vector<8x128xf32>
    %cst_83 = arith.constant dense<0.000000e+00> : vector<128xf32>
    %154 = vector.multi_reduction <add>, %153, %cst_83 [0] : vector<8x128xf32> to vector<128xf32>
    %155 = vector.shape_cast %154 : vector<128xf32> to vector<1x128xf32>
    %156 = arith.addf %151, %155 : vector<1x128xf32>
    %c0_84 = arith.constant 0 : index
    %c8_85 = arith.constant 8 : index
    %c0_86 = arith.constant 0 : index
    %157 = vector.load %arg4[%c0_84, %c8_85, %c0_86] : memref<1x16x128xf32, #tpu.memory_space<vmem>>, vector<1x1x128xf32>
    %158 = vector.shape_cast %157 : vector<1x1x128xf32> to vector<1x128xf32>
    %159 = vector.shape_cast %156 : vector<1x128xf32> to vector<1x1x128xf32>
    tpu.vector_store %arg4[%c0_84, %c8_85, %c0_86], %159 {strides = array<i32>} : memref<1x16x128xf32, #tpu.memory_space<vmem>>, vector<1x1x128xf32>,
    %c0_87 = arith.constant 0 : index
    %c12 = arith.constant 12 : index
    %c0_88 = arith.constant 0 : index
    %160 = vector.load %arg4[%c0_87, %c12, %c0_88] : memref<1x16x128xf32, #tpu.memory_space<vmem>>, vector<1x1x128xf32>
    %161 = vector.shape_cast %160 : vector<1x1x128xf32> to vector<1x128xf32>
    %162 = arith.extui %148 : vector<8x128xi1> to vector<8x128xi32>
    %163 = arith.sitofp %162 : vector<8x128xi32> to vector<8x128xf32>
    %cst_89 = arith.constant dense<0.000000e+00> : vector<128xf32>
    %164 = vector.multi_reduction <add>, %163, %cst_89 [0] : vector<8x128xf32> to vector<128xf32>
    %165 = vector.shape_cast %164 : vector<128xf32> to vector<1x128xf32>
    %166 = arith.addf %161, %165 : vector<1x128xf32>
    %c0_90 = arith.constant 0 : index
    %c12_91 = arith.constant 12 : index
    %c0_92 = arith.constant 0 : index
    %167 = vector.load %arg4[%c0_90, %c12_91, %c0_92] : memref<1x16x128xf32, #tpu.memory_space<vmem>>, vector<1x1x128xf32>
    %168 = vector.shape_cast %167 : vector<1x1x128xf32> to vector<1x128xf32>
    %169 = vector.shape_cast %166 : vector<1x128xf32> to vector<1x1x128xf32>
    tpu.vector_store %arg4[%c0_90, %c12_91, %c0_92], %169 {strides = array<i32>} : memref<1x16x128xf32, #tpu.memory_space<vmem>>, vector<1x1x128xf32>,
    return
  }
  func.func @transform_0(%arg0: i32, %arg1: i32) -> (i32, i32) {
    %c1_i32 = arith.constant 1 : i32
    %0 = arith.muli %arg0, %c1_i32 : i32
    %1 = arith.addi %0, %arg1 : i32
    %c0_i32 = arith.constant 0 : i32
    %c0_i32_0 = arith.constant 0 : i32
    return %1, %c0_i32 : i32, i32
  }
  func.func @transform_1(%arg0: i32, %arg1: i32) -> (i32, i32) {
    %c1_i32 = arith.constant 1 : i32
    %0 = arith.muli %arg0, %c1_i32 : i32
    %1 = arith.addi %0, %arg1 : i32
    %c0_i32 = arith.constant 0 : i32
    %c0_i32_0 = arith.constant 0 : i32
    return %1, %c0_i32 : i32, i32
  }
  func.func @transform_2(%arg0: i32, %arg1: i32) -> (i32, i32, i32) {
    %c0_i32 = arith.constant 0 : i32
    %c0_i32_0 = arith.constant 0 : i32
    %c0_i32_1 = arith.constant 0 : i32
    return %arg0, %c0_i32, %c0_i32_0 : i32, i32, i32
  }
}

</mosaic_0001>

<llo_original>
// kernel: f1mse_loss.1
$region0: #{f1mse_loss.1}
  #allocation0 [shape = 'u32[]', space=smem, size = 0x4, offset = 0x4, fixed_abs, tag = 'smem constant byte address 0x4 - core index']
  #allocation1 [shape = 'u32[144,128]{1,0:T(1,128)}', space=vmem, size = 0x12000, scoped, tag = 'internal scratch']
  %s0 = inlined_call_operand.vmem [shape: f32[16,128], index: 0, kind: input, shape index: {}]
  %s1 = inlined_call_operand.vmem [shape: f32[16,128], index: 1, kind: input, shape index: {}]
  %s2 = inlined_call_operand.vmem [shape: f32[2,16,128], index: 2, kind: output, shape index: {}]
  %s3 = sld [smem:[#allocation0]]
  $region45: #{f1mse_loss.1} parent=0
    _
  %s5 = ssub.s32 1, %s3
  %s6 = scalar_select 0, %s5, %s3
  loop: start=0, step=1, limit=4
  $region2: #{f1mse_loss.1} parent=0 // loop_pre_header
    _
  $region3: #{f1mse_loss.1} parent=0 // loop_header
    %s8 = sphi 0, %s12
    %p9 = scmp.ge.s32.totalorder %s8, 4
    %s15 = sphi 0, %s27
    %s16 = sphi 0, %s23
    %s17 = sphi 0, %s15
    %s18 = sphi 0, %s16
    %s19 = sphi 0, %s17
    %s20 = sphi 0, %s18
    %s32 = sphi 0, %s34
    %s35 = sphi 0, %s32
    %s36 = sphi 0, %s35
    %s52 = sphi 0, %s36
    %s60 = sphi 0, %s62
    %s63 = sphi 0, %s60
    %s64 = sphi 0, %s63
    %s80 = sphi 0, %s64
    %s86 = sphi 0, %s88
    %s89 = sphi 0, %s86
    %s90 = sphi 0, %s89
    %s106 = sphi 0, %s90
  $region4: #{f1mse_loss.1} parent=0 // loop_header_branch
    %11 = sbr.rel (%p9) target = $region8
  $region5: #{f1mse_loss.1} parent=0 // loop_body
    %s13 = ssub.s32 %s8, 1
    %s14 = ssub.s32 %s8, 2
    %s21 = sadd.s32 1, %s16
    %p22 = scmp.ge.s32.totalorder %s21, 1
    %s23 = scalar_select %p22, 0, %s21
    %s24 = sadd.s32 1, %s15
    %s25 = scalar_select %p22, %s24, %s15
    %p26 = scmp.ge.s32.totalorder %s25, 2
    %s27 = scalar_select %p26, 0, %s25
    %s28 = sadd.s32 %s15, %s16
    %s29 = sadd.s32 %s27, %s23
    %s30 = ssub.s32 %s28, %s29
    %p31 = scmp.eq.s32.totalorder %s30, 0
    %s33 = sadd.s32 %s32, 1
    %s34 = scalar_select %p31, %s32, %s33
    %p37 = pneg %p31
    %p38 = scmp.eq.s32.totalorder %s8, 1
    %p39 = por %p37, %p38
    %p40 = scmp.ne.s32.totalorder %s32, %s35
    %p41 = scmp.eq.s32.totalorder %s8, 0
    %p42 = por %p40, %p41
    %p43 = scmp.ne.s32.totalorder %s32, %s35
    %p44 = scmp.eq.s32.totalorder %s13, 1
    %p45 = por %p43, %p44
    %p46 = scmp.ne.s32.totalorder %s35, %s36
    %p47 = scmp.eq.s32.totalorder %s13, 0
    %p48 = por %p46, %p47
    %p49 = scmp.ne.s32.totalorder %s35, %s36
    %p50 = scmp.eq.s32.totalorder %s14, 1
    %p51 = por %p49, %p50
    %p53 = scmp.ne.s32.totalorder %s36, %s52
    %p54 = scmp.eq.s32.totalorder %s14, 0
    %p55 = por %p53, %p54
    %s56 = sadd.s32 %s15, %s16
    %s57 = sadd.s32 %s27, %s23
    %s58 = ssub.s32 %s56, %s57
    %p59 = scmp.eq.s32.totalorder %s58, 0
    %s61 = sadd.s32 %s60, 1
    %s62 = scalar_select %p59, %s60, %s61
    %p65 = pneg %p59
    %p66 = scmp.eq.s32.totalorder %s8, 1
    %p67 = por %p65, %p66
    %p68 = scmp.ne.s32.totalorder %s60, %s63
    %p69 = scmp.eq.s32.totalorder %s8, 0
    %p70 = por %p68, %p69
    %p71 = scmp.ne.s32.totalorder %s60, %s63
    %p72 = scmp.eq.s32.totalorder %s13, 1
    %p73 = por %p71, %p72
    %p74 = scmp.ne.s32.totalorder %s63, %s64
    %p75 = scmp.eq.s32.totalorder %s13, 0
    %p76 = por %p74, %p75
    %p77 = scmp.ne.s32.totalorder %s63, %s64
    %p78 = scmp.eq.s32.totalorder %s14, 1
    %p79 = por %p77, %p78
    %p81 = scmp.ne.s32.totalorder %s64, %s80
    %p82 = scmp.eq.s32.totalorder %s14, 0
    %p83 = por %p81, %p82
    %s84 = ssub.s32 %s15, %s27
    %p85 = scmp.eq.s32.totalorder %s84, 0
    %s87 = sadd.s32 %s86, 1
    %s88 = scalar_select %p85, %s86, %s87
    %p91 = pneg %p85
    %p92 = scmp.eq.s32.totalorder %s8, 1
    %p93 = por %p91, %p92
    %p94 = scmp.ne.s32.totalorder %s86, %s89
    %p95 = scmp.eq.s32.totalorder %s8, 0
    %p96 = por %p94, %p95
    %p97 = scmp.ne.s32.totalorder %s86, %s89
    %p98 = scmp.eq.s32.totalorder %s13, 1
    %p99 = por %p97, %p98
    %p100 = scmp.ne.s32.totalorder %s89, %s90
    %p101 = scmp.eq.s32.totalorder %s13, 0
    %p102 = por %p100, %p101
    %p103 = scmp.ne.s32.totalorder %s89, %s90
    %p104 = scmp.eq.s32.totalorder %s14, 1
    %p105 = por %p103, %p104
    %p107 = scmp.ne.s32.totalorder %s90, %s106
    %p108 = scmp.eq.s32.totalorder %s14, 0
    %p109 = por %p107, %p108
    %p110 = scmp.le.s32.totalorder 1, %s8
    %p111 = scmp.lt.s32.totalorder %s8, 3
    %p112 = pnand %p110, %p111
    %p113 = pneg %p112
    // Predicated region
    $region9: #{f1mse_loss.1} parent=5 // pred_check
      _
    $region10: #{f1mse_loss.1} parent=5 // pred_check_branch
      %115 = sbr.rel (%p112) target = $region12
    $region11: #{f1mse_loss.1} parent=5 // pred_region
      %s116 = ssub.s32 %s8, 1
    $region12: #{f1mse_loss.1} parent=5 // pred_fallthru
      _
    %p117 = scmp.lt.s32.totalorder %s8, 2
    // Predicated region
    $region13: #{f1mse_loss.1} parent=5 // pred_check
      %p118 = pneg %p117
    $region14: #{f1mse_loss.1} parent=5 // pred_check_branch
      %120 = sbr.rel (%p118) target = $region16
    $region15: #{f1mse_loss.1} parent=5 // pred_region
      // Predicated region
      $region17: #{f1mse_loss.1} parent=15 // pred_check
        %p121 = pneg %p42
      $region18: #{f1mse_loss.1} parent=15 // pred_check_branch
        %123 = sbr.rel (%p121) target = $region20
      $region19: #{f1mse_loss.1} parent=15 // pred_region
        %s124 = sadd.s32 %s15, %s16
        %p125 = scmp.lt.s32.totalorder %s124, 1
        %s126 = scalar_select %p125, %s124, 1
        %s127 = smul.addr %s126, 8
        %s128 = scalar_lea.vmem %s0, %s127
        %s129 = sadd.s32 %s15, %s16
      $region20: #{f1mse_loss.1} parent=15 // pred_fallthru
        _
      // Predicated region
      $region21: #{f1mse_loss.1} parent=15 // pred_check
        %p130 = pneg %p70
      $region22: #{f1mse_loss.1} parent=15 // pred_check_branch
        %132 = sbr.rel (%p130) target = $region24
      $region23: #{f1mse_loss.1} parent=15 // pred_region
        %s133 = sadd.s32 %s15, %s16
        %p134 = scmp.lt.s32.totalorder %s133, 1
        %s135 = scalar_select %p134, %s133, 1
        %s136 = smul.addr %s135, 8
        %s137 = scalar_lea.vmem %s1, %s136
        %s138 = sadd.s32 %s15, %s16
      $region24: #{f1mse_loss.1} parent=15 // pred_fallthru
        _
    $region16: #{f1mse_loss.1} parent=5 // pred_fallthru
      _
    %p139 = scmp.le.s32.totalorder 1, %s8
    %p140 = scmp.lt.s32.totalorder %s8, 3
    %p141 = pnand %p139, %p140
    %p142 = pneg %p141
    // Predicated region
    $region25: #{f1mse_loss.1} parent=5 // pred_check
      _
    $region26: #{f1mse_loss.1} parent=5 // pred_check_branch
      %144 = sbr.rel (%p141) target = $region28
    $region27: #{f1mse_loss.1} parent=5 // pred_region
      %s145 = ssub.s32 %s8, 1
      %s146 = sadd.s32 %s17, %s18
      %p147 = scmp.lt.s32.totalorder %s146, 1
      %s148 = scalar_select %p147, %s146, 1
      %s149 = smul.addr %s148, 8
      %s150 = scalar_lea.vmem %s0, %s149
      %p151 = pneg %p48
      %p152 = pneg %p45
      %s153 = sadd.s32 %s17, %s18
      %p154 = scmp.lt.s32.totalorder %s153, 1
      %s155 = scalar_select %p154, %s153, 1
      %s156 = smul.addr %s155, 8
      %s157 = scalar_lea.vmem %s1, %s156
      %p158 = pneg %p76
      %p159 = pneg %p73
      %p160 = pneg %p102
      %p161 = pneg %p99
      %p162 = scmp.lt.s32.totalorder %s17, 1
      %s163 = scalar_select %p162, %s17, 1
      %s164 = smul.addr %s163, 2
      %s165 = smul.addr %s164, 8
      %s166 = scalar_lea.vmem %s2, %s165
      %s167 = sadd.s32 %s17, %s18
      %p168 = scmp.lt.s32.totalorder %s167, 1
      %s169 = scalar_select %p168, %s167, 1
      %s170 = smul.addr %s169, 8
      %s171 = scalar_lea.vmem %s0, %s170
      %s172 = sadd.s32 %s17, %s18
      %s173 = sadd.s32 %s17, %s18
      %p174 = scmp.lt.s32.totalorder %s173, 1
      %s175 = scalar_select %p174, %s173, 1
      %s176 = smul.addr %s175, 8
      %s177 = scalar_lea.vmem %s1, %s176
      %s178 = sadd.s32 %s17, %s18
      %p179 = scmp.lt.s32.totalorder %s17, 1
      %s180 = scalar_select %p179, %s17, 1
      %s181 = smul.addr %s180, 2
      %s182 = smul.addr %s181, 8
      %s183 = scalar_lea.vmem %s2, %s182
      %p184 = scmp.eq.s32.totalorder %s18, 0
      // Predicated region
      $region29: #{f1mse_loss.1} parent=27 // pred_check
        %p185 = pneg %p184
      $region30: #{f1mse_loss.1} parent=27 // pred_check_branch
        %187 = sbr.rel (%p185) target = $region32
      $region31: #{f1mse_loss.1} parent=27 // pred_region
        %188 = vst [vmem:[%s183] sm:$0xff] 0.0
        %189 = vst [vmem:[%s183 + $0x8] sm:$0xff] 0.0
      $region32: #{f1mse_loss.1} parent=27 // pred_fallthru
        _
      %v190 = vld [vmem:[%s171] sm:$0xff]
      %v191 = vld [vmem:[%s177] sm:$0xff]
      %v192 = vsub.f32 %v190, %v191
      %v193 = vld [vmem:[%s183 + $0xd] sm:$0x1]
      %v194 = vmul.f32 %v192, %v192
      %v195 = vrot.slane %v194, 4
      %v196 = vadd.f32 %v194, %v195
      %v197 = vrot.slane %v196, 2
      %v198 = vadd.f32 %v196, %v197
      %v199 = vrot.slane %v198, 1
      %v200 = vadd.f32 %v198, %v199
      %v201 = vadd.f32 %v193, %v200
      %202 = vst [vmem:[%s183 + $0xd] sm:$0x1] %v201
      %v203 = vcvt.f32.s32.to.zero.pseudo %v190
      %v204 = vcvt.f32.s32.to.zero.pseudo %v191
      %vm205 = vcmp.eq.s32.totalorder %v203, %v204
      %vm206 = vcmp.eq.s32.totalorder %v204, 0
      %v207 = vld [vmem:[%s183] sm:$0x1]
      %v208 = vsel %vm206, 1, 0
      %v209 = vcvt.s32.f32 %v208
      %v210 = vrot.slane %v209, 4
      %v211 = vadd.f32 %v209, %v210
      %v212 = vrot.slane %v211, 2
      %v213 = vadd.f32 %v211, %v212
      %v214 = vrot.slane %v213, 1
      %v215 = vadd.f32 %v213, %v214
      %v216 = vadd.f32 %v207, %v215
      %217 = vst [vmem:[%s183] sm:$0x1] %v216
      %vm218 = vcmp.eq.s32.totalorder %v204, 1
      %v219 = vld [vmem:[%s183 + $0x1] sm:$0x1]
      %v220 = vsel %vm218, 1, 0
      %v221 = vcvt.s32.f32 %v220
      %v222 = vrot.slane %v221, 4
      %v223 = vadd.f32 %v221, %v222
      %v224 = vrot.slane %v223, 2
      %v225 = vadd.f32 %v223, %v224
      %v226 = vrot.slane %v225, 1
      %v227 = vadd.f32 %v225, %v226
      %v228 = vadd.f32 %v219, %v227
      %229 = vst [vmem:[%s183 + $0x1] sm:$0x1] %v228
      %vm230 = vcmp.eq.s32.totalorder %v203, 1
      %vm231 = vmand %vm205, %vm218
      %v232 = vld [vmem:[%s183 + $0x5] sm:$0x1]
      %v233 = vsel %vm231, 1, 0
      %v234 = vcvt.s32.f32 %v233
      %v235 = vrot.slane %v234, 4
      %v236 = vadd.f32 %v234, %v235
      %v237 = vrot.slane %v236, 2
      %v238 = vadd.f32 %v236, %v237
      %v239 = vrot.slane %v238, 1
      %v240 = vadd.f32 %v238, %v239
      %v241 = vadd.f32 %v232, %v240
      %242 = vst [vmem:[%s183 + $0x5] sm:$0x1] %v241
      %v243 = vld [vmem:[%s183 + $0x9] sm:$0x1]
      %v244 = vsel %vm230, 1, 0
      %v245 = vcvt.s32.f32 %v244
      %v246 = vrot.slane %v245, 4
      %v247 = vadd.f32 %v245, %v246
      %v248 = vrot.slane %v247, 2
      %v249 = vadd.f32 %v247, %v248
      %v250 = vrot.slane %v249, 1
      %v251 = vadd.f32 %v249, %v250
      %v252 = vadd.f32 %v243, %v251
      %253 = vst [vmem:[%s183 + $0x9] sm:$0x1] %v252
      %vm254 = vcmp.eq.s32.totalorder %v204, 2
      %v255 = vld [vmem:[%s183 + $0x2] sm:$0x1]
      %v256 = vsel %vm254, 1, 0
      %v257 = vcvt.s32.f32 %v256
      %v258 = vrot.slane %v257, 4
      %v259 = vadd.f32 %v257, %v258
      %v260 = vrot.slane %v259, 2
      %v261 = vadd.f32 %v259, %v260
      %v262 = vrot.slane %v261, 1
      %v263 = vadd.f32 %v261, %v262
      %v264 = vadd.f32 %v255, %v263
      %265 = vst [vmem:[%s183 + $0x2] sm:$0x1] %v264
      %vm266 = vcmp.eq.s32.totalorder %v203, 2
      %vm267 = vmand %vm205, %vm254
      %v268 = vld [vmem:[%s183 + $0x6] sm:$0x1]
      %v269 = vsel %vm267, 1, 0
      %v270 = vcvt.s32.f32 %v269
      %v271 = vrot.slane %v270, 4
      %v272 = vadd.f32 %v270, %v271
      %v273 = vrot.slane %v272, 2
      %v274 = vadd.f32 %v272, %v273
      %v275 = vrot.slane %v274, 1
      %v276 = vadd.f32 %v274, %v275
      %v277 = vadd.f32 %v268, %v276
      %278 = vst [vmem:[%s183 + $0x6] sm:$0x1] %v277
      %v279 = vld [vmem:[%s183 + $0xa] sm:$0x1]
      %v280 = vsel %vm266, 1, 0
      %v281 = vcvt.s32.f32 %v280
      %v282 = vrot.slane %v281, 4
      %v283 = vadd.f32 %v281, %v282
      %v284 = vrot.slane %v283, 2
      %v285 = vadd.f32 %v283, %v284
      %v286 = vrot.slane %v285, 1
      %v287 = vadd.f32 %v285, %v286
      %v288 = vadd.f32 %v279, %v287
      %289 = vst [vmem:[%s183 + $0xa] sm:$0x1] %v288
      %vm290 = vcmp.eq.s32.totalorder %v204, 3
      %v291 = vld [vmem:[%s183 + $0x3] sm:$0x1]
      %v292 = vsel %vm290, 1, 0
      %v293 = vcvt.s32.f32 %v292
      %v294 = vrot.slane %v293, 4
      %v295 = vadd.f32 %v293, %v294
      %v296 = vrot.slane %v295, 2
      %v297 = vadd.f32 %v295, %v296
      %v298 = vrot.slane %v297, 1
      %v299 = vadd.f32 %v297, %v298
      %v300 = vadd.f32 %v291, %v299
      %301 = vst [vmem:[%s183 + $0x3] sm:$0x1] %v300
      %vm302 = vcmp.eq.s32.totalorder %v203, 3
      %vm303 = vmand %vm205, %vm290
      %v304 = vld [vmem:[%s183 + $0x7] sm:$0x1]
      %v305 = vsel %vm303, 1, 0
      %v306 = vcvt.s32.f32 %v305
      %v307 = vrot.slane %v306, 4
      %v308 = vadd.f32 %v306, %v307
      %v309 = vrot.slane %v308, 2
      %v310 = vadd.f32 %v308, %v309
      %v311 = vrot.slane %v310, 1
      %v312 = vadd.f32 %v310, %v311
      %v313 = vadd.f32 %v304, %v312
      %314 = vst [vmem:[%s183 + $0x7] sm:$0x1] %v313
      %v315 = vld [vmem:[%s183 + $0xb] sm:$0x1]
      %v316 = vsel %vm302, 1, 0
      %v317 = vcvt.s32.f32 %v316
      %v318 = vrot.slane %v317, 4
      %v319 = vadd.f32 %v317, %v318
      %v320 = vrot.slane %v319, 2
      %v321 = vadd.f32 %v319, %v320
      %v322 = vrot.slane %v321, 1
      %v323 = vadd.f32 %v321, %v322
      %v324 = vadd.f32 %v315, %v323
      %325 = vst [vmem:[%s183 + $0xb] sm:$0x1] %v324
      %vm326 = vcmp.eq.s32.totalorder %v204, 4
      %v327 = vld [vmem:[%s183 + $0x4] sm:$0x1]
      %v328 = vsel %vm326, 1, 0
      %v329 = vcvt.s32.f32 %v328
      %v330 = vrot.slane %v329, 4
      %v331 = vadd.f32 %v329, %v330
      %v332 = vrot.slane %v331, 2
      %v333 = vadd.f32 %v331, %v332
      %v334 = vrot.slane %v333, 1
      %v335 = vadd.f32 %v333, %v334
      %v336 = vadd.f32 %v327, %v335
      %337 = vst [vmem:[%s183 + $0x4] sm:$0x1] %v336
      %vm338 = vcmp.eq.s32.totalorder %v203, 4
      %vm339 = vmand %vm205, %vm326
      %v340 = vld [vmem:[%s183 + $0x8] sm:$0x1]
      %v341 = vsel %vm339, 1, 0
      %v342 = vcvt.s32.f32 %v341
      %v343 = vrot.slane %v342, 4
      %v344 = vadd.f32 %v342, %v343
      %v345 = vrot.slane %v344, 2
      %v346 = vadd.f32 %v344, %v345
      %v347 = vrot.slane %v346, 1
      %v348 = vadd.f32 %v346, %v347
      %v349 = vadd.f32 %v340, %v348
      %350 = vst [vmem:[%s183 + $0x8] sm:$0x1] %v349
      %v351 = vld [vmem:[%s183 + $0xc] sm:$0x1]
      %v352 = vsel %vm338, 1, 0
      %v353 = vcvt.s32.f32 %v352
      %v354 = vrot.slane %v353, 4
      %v355 = vadd.f32 %v353, %v354
      %v356 = vrot.slane %v355, 2
      %v357 = vadd.f32 %v355, %v356
      %v358 = vrot.slane %v357, 1
      %v359 = vadd.f32 %v357, %v358
      %v360 = vadd.f32 %v351, %v359
      %361 = vst [vmem:[%s183 + $0xc] sm:$0x1] %v360
      %p362 = scmp.lt.s32.totalorder %s17, 1
      %s363 = scalar_select %p362, %s17, 1
      %s364 = smul.addr %s363, 2
      %s365 = smul.addr %s364, 8
      %s366 = scalar_lea.vmem %s2, %s365
      // Predicated region
      $region33: #{f1mse_loss.1} parent=27 // pred_check
        %p367 = pneg %p99
      $region34: #{f1mse_loss.1} parent=27 // pred_check_branch
        %369 = sbr.rel (%p367) target = $region36
      $region35: #{f1mse_loss.1} parent=27 // pred_region
        _
      $region36: #{f1mse_loss.1} parent=27 // pred_fallthru
        _
    $region28: #{f1mse_loss.1} parent=5 // pred_fallthru
      _
    %p370 = scmp.le.s32.totalorder 2, %s8
    // Predicated region
    $region37: #{f1mse_loss.1} parent=5 // pred_check
      %p371 = pneg %p370
    $region38: #{f1mse_loss.1} parent=5 // pred_check_branch
      %373 = sbr.rel (%p371) target = $region40
    $region39: #{f1mse_loss.1} parent=5 // pred_region
      %s374 = ssub.s32 %s8, 2
      // Predicated region
      $region41: #{f1mse_loss.1} parent=39 // pred_check
        %p375 = pneg %p105
      $region42: #{f1mse_loss.1} parent=39 // pred_check_branch
        %377 = sbr.rel (%p375) target = $region44
      $region43: #{f1mse_loss.1} parent=39 // pred_region
        %p378 = scmp.lt.s32.totalorder %s19, 1
        %s379 = scalar_select %p378, %s19, 1
        %s380 = smul.addr %s379, 2
        %s381 = smul.addr %s380, 8
        %s382 = scalar_lea.vmem %s2, %s381
      $region44: #{f1mse_loss.1} parent=39 // pred_fallthru
        _
    $region40: #{f1mse_loss.1} parent=5 // pred_fallthru
      _
  $region6: #{f1mse_loss.1} parent=0 // loop_footer
    %s12 = sadd.s32 1, %s8
  $region7: #{f1mse_loss.1} parent=0 // loop_footer_branch
    %7 = sbr.rel target = $region3
  $region8: #{f1mse_loss.1} parent=0 // loop_exit
    _

</llo_original>
